<compile_context>
chip_gen: v5e
topology: v5e:2x2
jax: 0.10.0
libtpu: 0.0.40
codegen_flags: <defaults>
</compile_context>

<pallas_src>
import jax
import jax.numpy as jnp
from jax.experimental import pallas as pl
from jax.experimental.pallas import tpu as pltpu

HIDDEN = 128


def _stats_net_kernel(xt_ref, w1t_ref, b1_ref, w2t_ref, b2_ref,
                      w3t_ref, b3_ref, wht_ref, bh_ref, o_ref):
    """One batch tile of the StatisticsNetwork forward pass.

    All activations are kept in (hidden, batch_tile) orientation so the batch
    dimension stays in the MXU lane/N axis end-to-end.
    """
    bf16, f32 = jnp.bfloat16, jnp.float32

    # layer1 (+ReLU): (H, F) @ (F, bt) -> (H, bt); single fused K=16 dot.
    a = jnp.dot(w1t_ref[...], xt_ref[...], preferred_element_type=f32) + b1_ref[...]
    a = jnp.maximum(a, 0.0)

    # layer2 (+ReLU): (H, H) @ (H, bt) -> (H, bt)
    a = jnp.dot(w2t_ref[...], a.astype(bf16), preferred_element_type=f32) + b2_ref[...]
    a = jnp.maximum(a, 0.0)

    # layer3 (+ReLU)
    a = jnp.dot(w3t_ref[...], a.astype(bf16), preferred_element_type=f32) + b3_ref[...]
    a = jnp.maximum(a, 0.0)

    # head: (1, H) @ (H, bt) -> (1, bt), already lane-dense; scalar bias from SMEM.
    head = jnp.dot(wht_ref[...], a.astype(bf16), preferred_element_type=f32)
    o_ref[...] = (head + bh_ref[0]).astype(o_ref.dtype)


def init_params(key, in_features1, in_features2, hidden=HIDDEN):
    """nn.Linear-style U(-1/sqrt(fan_in), 1/sqrt(fan_in)) init.

    "Math" layout: weights are (in, out) (transpose of PyTorch), biases (1, out).
    """
    fin = in_features1 + in_features2
    dims = [(fin, hidden), (hidden, hidden), (hidden, hidden), (hidden, 1)]
    names = ["1", "2", "3", "h"]
    params = {}
    for (d_in, d_out), nm in zip(dims, names):
        key, kw, kb = jax.random.split(key, 3)
        bound = 1.0 / (d_in ** 0.5)
        params[f"w{nm}"] = jax.random.uniform(
            kw, (d_in, d_out), jnp.float32, -bound, bound)
        params[f"b{nm}"] = jax.random.uniform(
            kb, (1, d_out), jnp.float32, -bound, bound)
    return params


def pack_params(params):
    """Convert math-layout params to the kernel's transposed operand layout."""
    bf16, f32 = jnp.bfloat16, jnp.float32
    return dict(
        w1t=params["w1"].T.astype(bf16),               # (H, F1+F2) bf16
        b1=params["b1"].reshape(-1, 1).astype(f32),    # (H, 1)     f32
        w2t=params["w2"].T.astype(bf16),               # (H, H)     bf16
        b2=params["b2"].reshape(-1, 1).astype(f32),
        w3t=params["w3"].T.astype(bf16),
        b3=params["b3"].reshape(-1, 1).astype(f32),
        wht=params["wh"].reshape(1, -1).astype(bf16),  # (1, H)     bf16
        bh=params["bh"].reshape(-1).astype(f32),       # (1,)       f32 scalar (SMEM)
    )


def _choose_batch_tile(batch, requested):
    """Pick a batch tile (multiple of 128) that keeps the grid pipelined."""
    bt = max(128, (requested // 128) * 128)
    # Never bigger than the padded batch.
    bt = min(bt, pl.cdiv(batch, 128) * 128)
    # Prefer a grid of >= 2 steps (input pipelining; v7x two-TC split).
    if batch > 128 and pl.cdiv(batch, bt) < 2:
        bt = pl.cdiv(pl.cdiv(batch, 2), 128) * 128
    return bt


def statistics_network_forward(x, y, kparams, *, batch_tile=1024):
    """Pallas forward of StatisticsNetwork. x: (B,F1), y: (B,F2) -> (B,1) f32."""
    B, f1 = x.shape
    By, f2 = y.shape
    assert By == B
    hidden, f = kparams["w1t"].shape
    assert f == f1 + f2

    # Concat + transpose + bf16 cast in the wrapper: cheap (F = f1+f2 is tiny)
    # and lets the kernel run one fused K=f layer1 dot on bf16 operands.
    xt = jnp.concatenate([x, y], axis=1).astype(jnp.bfloat16).T   # (F, B)

    bt = _choose_batch_tile(B, batch_tile)
    b_pad = pl.cdiv(B, bt) * bt
    if b_pad != B:
        # Padded lanes compute garbage (bias flows through the ReLUs) but are
        # sliced off below; nothing ever reads them.
        xt = jnp.pad(xt, ((0, 0), (0, b_pad - B)))
    grid = (b_pad // bt,)

    def _const(shape):
        # Same block every grid step -> Pallas fetches it only once.
        return pl.BlockSpec(shape, lambda i: (0, 0))

    cost = pl.CostEstimate(
        flops=2 * b_pad * (f * hidden + 2 * hidden * hidden + hidden),
        transcendentals=0,
        bytes_accessed=(b_pad * f * 2                                     # bf16 input
                        + (hidden * f + 2 * hidden * hidden + hidden) * 2  # bf16 weights
                        + (3 * hidden + 1) * 4                             # f32 biases
                        + b_pad * 4))                                      # f32 output

    out_row = pl.pallas_call(
        _stats_net_kernel,
        out_shape=jax.ShapeDtypeStruct((1, b_pad), jnp.float32),
        grid=grid,
        in_specs=[
            pl.BlockSpec((f, bt), lambda i: (0, i)),                 # input tile (F, bt)
            _const((hidden, f)), _const((hidden, 1)),                # layer1
            _const((hidden, hidden)), _const((hidden, 1)),           # layer2
            _const((hidden, hidden)), _const((hidden, 1)),           # layer3
            _const((1, hidden)),                                     # head W
            pl.BlockSpec(memory_space=pltpu.MemorySpace.SMEM),       # head b (scalar)
        ],
        out_specs=pl.BlockSpec((1, bt), lambda i: (0, i)),           # lane-dense output
        compiler_params=pltpu.CompilerParams(
            dimension_semantics=("parallel",)),
        cost_estimate=cost,
    )(xt,
      kparams["w1t"], kparams["b1"],
      kparams["w2t"], kparams["b2"],
      kparams["w3t"], kparams["b3"],
      kparams["wht"], kparams["bh"])

    # (1, b_pad) row-major == (b_pad, 1); slice off the padded tail.
    return out_row.reshape(b_pad, 1)[:B]


def _reference_forward_f32(x, y, params):
    """Pure-JAX f32 reference of the PyTorch module (loose check)."""
    h = jnp.concatenate([x, y], axis=1)
    h = jnp.maximum(h @ params["w1"] + params["b1"], 0.0)
    h = jnp.maximum(h @ params["w2"] + params["b2"], 0.0)
    h = jnp.maximum(h @ params["w3"] + params["b3"], 0.0)
    return h @ params["wh"] + params["bh"]


def _reference_forward_bf16(x, y, kp):
    """Pure-JAX reference matching the kernel numerics (bf16 MXU, f32 accum)."""
    bf16, f32 = jnp.bfloat16, jnp.float32
    xt = jnp.concatenate([x, y], axis=1).astype(bf16).T
    a = jnp.dot(kp["w1t"], xt, preferred_element_type=f32) + kp["b1"]
    a = jnp.maximum(a, 0.0)
    a = jnp.dot(kp["w2t"], a.astype(bf16), preferred_element_type=f32) + kp["b2"]
    a = jnp.maximum(a, 0.0)
    a = jnp.dot(kp["w3t"], a.astype(bf16), preferred_element_type=f32) + kp["b3"]
    a = jnp.maximum(a, 0.0)
    out = jnp.dot(kp["wht"], a.astype(bf16), preferred_element_type=f32) + kp["bh"][0]
    return out.T   # (B, 1)


if __name__ == "__main__":
    key = jax.random.PRNGKey(0)
    kx, ky, kp = jax.random.split(key, 3)

    # Small shapes: in_features1 = in_features2 = 8, hidden = 128.
    F1, F2 = 8, 8
    params = init_params(kp, F1, F2)
    kparams = pack_params(params)

    # Case 1: batch = 512.  The tile heuristic shrinks the 1024 default to 256
    # -> grid of 2 (pipelined; shards across both TensorCores on v7x).
    B = 512
    x = jax.random.normal(kx, (B, F1), jnp.float32)
    y = jax.random.normal(ky, (B, F2), jnp.float32)

    out = jax.block_until_ready(statistics_network_forward(x, y, kparams))
    assert out.shape == (B, 1), out.shape

    ref_bf16 = _reference_forward_bf16(x, y, kparams)
    assert jnp.allclose(out, ref_bf16, atol=5e-3, rtol=5e-3), \
        "mismatch vs bf16-emulating reference"

    ref_f32 = _reference_forward_f32(x, y, params)
    assert jnp.allclose(out, ref_f32, atol=5e-2, rtol=5e-2), \
        "mismatch vs f32 reference"

    # Case 2: ragged batch (exercises the batch-padding path).
    B2 = 100
    out2 = jax.block_until_ready(
        statistics_network_forward(x[:B2], y[:B2], kparams))
    assert out2.shape == (B2, 1), out2.shape
    assert jnp.allclose(out2, out[:B2], atol=1e-5, rtol=1e-5), \
        "padding path mismatch"

    print("KERNEL_OK")
</pallas_src>

<mosaic_0001>
module attributes {stable_mosaic.version = 11 : i64} {
  func.func @_stats_net_kernel(%arg0: i32, %arg1: memref<16x256xbf16, #tpu.memory_space<vmem>>, %arg2: memref<128x16xbf16, #tpu.memory_space<vmem>>, %arg3: memref<128x1xf32, #tpu.memory_space<vmem>>, %arg4: memref<128x128xbf16, #tpu.memory_space<vmem>>, %arg5: memref<128x1xf32, #tpu.memory_space<vmem>>, %arg6: memref<128x128xbf16, #tpu.memory_space<vmem>>, %arg7: memref<128x1xf32, #tpu.memory_space<vmem>>, %arg8: memref<1x128xbf16, #tpu.memory_space<vmem>>, %arg9: memref<1xf32, #tpu.memory_space<smem>>, %arg10: memref<1x256xf32, #tpu.memory_space<vmem>>) attributes {dimension_semantics = [#tpu.dimension_semantics<parallel>], iteration_bounds = array<i64: 2>, scalar_prefetch = 0 : i64, scratch_operands = 0 : i64, tpu.core_type = #tpu.core_type<tc>, window_params = [{transform_indices = @transform_0, window_bounds = array<i64: 16, 256>}, {pipeline_mode = #tpu.pipeline_mode<synchronous>, transform_indices = @transform_1, window_bounds = array<i64: 128, 16>}, {pipeline_mode = #tpu.pipeline_mode<synchronous>, transform_indices = @transform_2, window_bounds = array<i64: 128, 1>}, {pipeline_mode = #tpu.pipeline_mode<synchronous>, transform_indices = @transform_3, window_bounds = array<i64: 128, 128>}, {pipeline_mode = #tpu.pipeline_mode<synchronous>, transform_indices = @transform_4, window_bounds = array<i64: 128, 1>}, {pipeline_mode = #tpu.pipeline_mode<synchronous>, transform_indices = @transform_5, window_bounds = array<i64: 128, 128>}, {pipeline_mode = #tpu.pipeline_mode<synchronous>, transform_indices = @transform_6, window_bounds = array<i64: 128, 1>}, {pipeline_mode = #tpu.pipeline_mode<synchronous>, transform_indices = @transform_7, window_bounds = array<i64: 1, 128>}, {transform_indices = @transform_8, window_bounds = array<i64: 1>}, {transform_indices = @transform_9, window_bounds = array<i64: 1, 256>}]} {
    %c0 = arith.constant 0 : index
    %c0_0 = arith.constant 0 : index
    %0 = vector.load %arg2[%c0, %c0_0] : memref<128x16xbf16, #tpu.memory_space<vmem>>, vector<128x16xbf16>
    %c0_1 = arith.constant 0 : index
    %c0_2 = arith.constant 0 : index
    %1 = vector.load %arg1[%c0_1, %c0_2] : memref<16x256xbf16, #tpu.memory_space<vmem>>, vector<16x256xbf16>
    %cst = arith.constant dense<0.000000e+00> : vector<128x256xf32>
    %2 = tpu.matmul %0, %1, %cst {dimension_numbers = #tpu.dot_dimension_numbers<[1], [0], [0], [1], [0, 0, 1, 1], [], []>} : vector<128x16xbf16>, vector<16x256xbf16>, vector<128x256xf32> -> vector<128x256xf32>
    %c0_3 = arith.constant 0 : index
    %c0_4 = arith.constant 0 : index
    %3 = vector.load %arg3[%c0_3, %c0_4] : memref<128x1xf32, #tpu.memory_space<vmem>>, vector<128x1xf32>
    %4 = vector.broadcast %3 : vector<128x1xf32> to vector<128x256xf32>
    %5 = arith.addf %2, %4 : vector<128x256xf32>
    %cst_5 = arith.constant 0.000000e+00 : f32
    %6 = vector.broadcast %cst_5 : f32 to vector<128x256xf32>
    %7 = arith.maximumf %5, %6 : vector<128x256xf32>
    %c0_6 = arith.constant 0 : index
    %c0_7 = arith.constant 0 : index
    %8 = vector.load %arg4[%c0_6, %c0_7] : memref<128x128xbf16, #tpu.memory_space<vmem>>, vector<128x128xbf16>
    %9 = arith.truncf %7 : vector<128x256xf32> to vector<128x256xbf16>
    %cst_8 = arith.constant dense<0.000000e+00> : vector<128x256xf32>
    %10 = tpu.matmul %8, %9, %cst_8 {dimension_numbers = #tpu.dot_dimension_numbers<[1], [0], [0], [1], [0, 0, 1, 1], [], []>} : vector<128x128xbf16>, vector<128x256xbf16>, vector<128x256xf32> -> vector<128x256xf32>
    %c0_9 = arith.constant 0 : index
    %c0_10 = arith.constant 0 : index
    %11 = vector.load %arg5[%c0_9, %c0_10] : memref<128x1xf32, #tpu.memory_space<vmem>>, vector<128x1xf32>
    %12 = vector.broadcast %11 : vector<128x1xf32> to vector<128x256xf32>
    %13 = arith.addf %10, %12 : vector<128x256xf32>
    %cst_11 = arith.constant 0.000000e+00 : f32
    %14 = vector.broadcast %cst_11 : f32 to vector<128x256xf32>
    %15 = arith.maximumf %13, %14 : vector<128x256xf32>
    %c0_12 = arith.constant 0 : index
    %c0_13 = arith.constant 0 : index
    %16 = vector.load %arg6[%c0_12, %c0_13] : memref<128x128xbf16, #tpu.memory_space<vmem>>, vector<128x128xbf16>
    %17 = arith.truncf %15 : vector<128x256xf32> to vector<128x256xbf16>
    %cst_14 = arith.constant dense<0.000000e+00> : vector<128x256xf32>
    %18 = tpu.matmul %16, %17, %cst_14 {dimension_numbers = #tpu.dot_dimension_numbers<[1], [0], [0], [1], [0, 0, 1, 1], [], []>} : vector<128x128xbf16>, vector<128x256xbf16>, vector<128x256xf32> -> vector<128x256xf32>
    %c0_15 = arith.constant 0 : index
    %c0_16 = arith.constant 0 : index
    %19 = vector.load %arg7[%c0_15, %c0_16] : memref<128x1xf32, #tpu.memory_space<vmem>>, vector<128x1xf32>
    %20 = vector.broadcast %19 : vector<128x1xf32> to vector<128x256xf32>
    %21 = arith.addf %18, %20 : vector<128x256xf32>
    %cst_17 = arith.constant 0.000000e+00 : f32
    %22 = vector.broadcast %cst_17 : f32 to vector<128x256xf32>
    %23 = arith.maximumf %21, %22 : vector<128x256xf32>
    %c0_18 = arith.constant 0 : index
    %c0_19 = arith.constant 0 : index
    %24 = vector.load %arg8[%c0_18, %c0_19] : memref<1x128xbf16, #tpu.memory_space<vmem>>, vector<1x128xbf16>
    %25 = arith.truncf %23 : vector<128x256xf32> to vector<128x256xbf16>
    %cst_20 = arith.constant dense<0.000000e+00> : vector<1x256xf32>
    %26 = tpu.matmul %24, %25, %cst_20 {dimension_numbers = #tpu.dot_dimension_numbers<[1], [0], [0], [1], [0, 0, 1, 1], [], []>} : vector<1x128xbf16>, vector<128x256xbf16>, vector<1x256xf32> -> vector<1x256xf32>
    %c0_21 = arith.constant 0 : index
    %27 = memref.load %arg9[%c0_21] : memref<1xf32, #tpu.memory_space<smem>>
    %28 = vector.broadcast %27 : f32 to vector<1x256xf32>
    %29 = arith.addf %26, %28 : vector<1x256xf32>
    %c0_22 = arith.constant 0 : index
    %c0_23 = arith.constant 0 : index
    %30 = vector.load %arg10[%c0_22, %c0_23] : memref<1x256xf32, #tpu.memory_space<vmem>>, vector<1x256xf32>
    tpu.vector_store %arg10[%c0_22, %c0_23], %29 {strides = array<i32>} : memref<1x256xf32, #tpu.memory_space<vmem>>, vector<1x256xf32>,
    return
  }
  func.func @transform_0(%arg0: i32) -> (i32, i32) {
    %c0_i32 = arith.constant 0 : i32
    %c0_i32_0 = arith.constant 0 : i32
    return %c0_i32, %arg0 : i32, i32
  }
  func.func @transform_1(%arg0: i32) -> (i32, i32) {
    %c0_i32 = arith.constant 0 : i32
    %c0_i32_0 = arith.constant 0 : i32
    %c0_i32_1 = arith.constant 0 : i32
    return %c0_i32, %c0_i32_0 : i32, i32
  }
  func.func @transform_2(%arg0: i32) -> (i32, i32) {
    %c0_i32 = arith.constant 0 : i32
    %c0_i32_0 = arith.constant 0 : i32
    %c0_i32_1 = arith.constant 0 : i32
    return %c0_i32, %c0_i32_0 : i32, i32
  }
  func.func @transform_3(%arg0: i32) -> (i32, i32) {
    %c0_i32 = arith.constant 0 : i32
    %c0_i32_0 = arith.constant 0 : i32
    %c0_i32_1 = arith.constant 0 : i32
    return %c0_i32, %c0_i32_0 : i32, i32
  }
  func.func @transform_4(%arg0: i32) -> (i32, i32) {
    %c0_i32 = arith.constant 0 : i32
    %c0_i32_0 = arith.constant 0 : i32
    %c0_i32_1 = arith.constant 0 : i32
    return %c0_i32, %c0_i32_0 : i32, i32
  }
  func.func @transform_5(%arg0: i32) -> (i32, i32) {
    %c0_i32 = arith.constant 0 : i32
    %c0_i32_0 = arith.constant 0 : i32
    %c0_i32_1 = arith.constant 0 : i32
    return %c0_i32, %c0_i32_0 : i32, i32
  }
  func.func @transform_6(%arg0: i32) -> (i32, i32) {
    %c0_i32 = arith.constant 0 : i32
    %c0_i32_0 = arith.constant 0 : i32
    %c0_i32_1 = arith.constant 0 : i32
    return %c0_i32, %c0_i32_0 : i32, i32
  }
  func.func @transform_7(%arg0: i32) -> (i32, i32) {
    %c0_i32 = arith.constant 0 : i32
    %c0_i32_0 = arith.constant 0 : i32
    %c0_i32_1 = arith.constant 0 : i32
    return %c0_i32, %c0_i32_0 : i32, i32
  }
  func.func @transform_8(%arg0: i32) -> i32 {
    %c0_i32 = arith.constant 0 : i32
    %c0_i32_0 = arith.constant 0 : i32
    return %c0_i32 : i32
  }
  func.func @transform_9(%arg0: i32) -> (i32, i32) {
    %c0_i32 = arith.constant 0 : i32
    %c0_i32_0 = arith.constant 0 : i32
    return %c0_i32, %arg0 : i32, i32
  }
}

</mosaic_0001>

<llo_original>
// kernel: tpu_custom_call.1
$region0: #{tpu_custom_call.1}
  #allocation0 [shape = 'u32[]', space=smem, size = 0x4, offset = 0x4, fixed_abs, tag = 'smem constant byte address 0x4 - core index']
  #allocation1 [shape = 'u32[72,128]{1,0:T(1,128)}', space=vmem, size = 0x9000, scoped, tag = 'internal scratch']
  #allocation2 [shape = 'f32[1]{0:T(128)S(6)}', space=smem, size = 0x200, scoped, tag = 'scoped memory for tpu_custom_call.1']
  %s0 = inlined_call_operand.vmem [shape: bf16[16,512], index: 0, kind: input, shape index: {}]
  %s1 = inlined_call_operand.vmem [shape: bf16[128,16], index: 1, kind: input, shape index: {}]
  %s2 = inlined_call_operand.vmem [shape: f32[128,1], index: 2, kind: input, shape index: {}]
  %s3 = inlined_call_operand.vmem [shape: bf16[128,128], index: 3, kind: input, shape index: {}]
  %s4 = inlined_call_operand.vmem [shape: f32[128,1], index: 4, kind: input, shape index: {}]
  %s5 = inlined_call_operand.vmem [shape: bf16[128,128], index: 5, kind: input, shape index: {}]
  %s6 = inlined_call_operand.vmem [shape: f32[128,1], index: 6, kind: input, shape index: {}]
  %s7 = inlined_call_operand.vmem [shape: bf16[1,128], index: 7, kind: input, shape index: {}]
  %s8 = inlined_call_operand.<no memory space> [shape: f32[1], index: 8, kind: input, shape index: {}]
  %s9 = inlined_call_operand.hbm [shape: f32[1,512], index: 9, kind: output, shape index: {}]
  %s10 = sld [smem:[#allocation0]]
  $region107: #{tpu_custom_call.1} parent=0
    _
  %s12 = ssub.s32 1, %s10
  %s13 = scalar_select 0, %s12, %s10
  %14 = sst [smem:[#allocation2]] %s8
  $region1: #{tpu_custom_call.1} parent=0
    #allocation3 [shape = 'u8[16384]{0}', space=vmem, size = 0x4000, scoped, tag = 'input window, operand 0']
    #allocation4 [shape = 'u8[2048]{0}', space=vmem, size = 0x800, scoped, tag = 'output window, operand 0']
    #allocation5 [shape = 's32[2]{0}', space=sflag, size = 0x8, scoped, tag = 'scoped memory for tpu_custom_call.1']
    %15 = vsyncpa [#allocation5], 0
    %s16 = scalar_lea.sflag [#allocation5], 1
    %17 = vsyncpa %s16, 0
    loop: start=0, step=1, limit=4
    $region2: #{tpu_custom_call.1} parent=1 // loop_pre_header
      _
    $region3: #{tpu_custom_call.1} parent=1 // loop_header
      %s19 = sphi 0, %s23
      %p20 = scmp.ge.s32.totalorder %s19, 4
      %s29 = sphi 0, %s31
      %s32 = sphi 0, %s29
      %s33 = sphi 0, %s32
      %s49 = sphi 0, %s33
      %s53 = sphi 0, %s53
      %s55 = sphi 0, %s53
      %s56 = sphi 0, %s55
      %s70 = sphi 0, %s56
      %s74 = sphi 0, %s74
      %s76 = sphi 0, %s74
      %s77 = sphi 0, %s76
      %s91 = sphi 0, %s77
      %s95 = sphi 0, %s95
      %s97 = sphi 0, %s95
      %s98 = sphi 0, %s97
      %s112 = sphi 0, %s98
      %s116 = sphi 0, %s116
      %s118 = sphi 0, %s116
      %s119 = sphi 0, %s118
      %s133 = sphi 0, %s119
      %s137 = sphi 0, %s137
      %s139 = sphi 0, %s137
      %s140 = sphi 0, %s139
      %s154 = sphi 0, %s140
      %s158 = sphi 0, %s158
      %s160 = sphi 0, %s158
      %s161 = sphi 0, %s160
      %s175 = sphi 0, %s161
      %s179 = sphi 0, %s179
      %s181 = sphi 0, %s179
      %s182 = sphi 0, %s181
      %s196 = sphi 0, %s182
      %s200 = sphi 0, %s200
      %s202 = sphi 0, %s200
      %s203 = sphi 0, %s202
      %s217 = sphi 0, %s203
      %s223 = sphi 0, %s225
      %s226 = sphi 0, %s223
      %s227 = sphi 0, %s226
      %s243 = sphi 0, %s227
    $region4: #{tpu_custom_call.1} parent=1 // loop_header_branch
      %22 = sbr.rel (%p20) target = $region8
    $region5: #{tpu_custom_call.1} parent=1 // loop_body
      %s24 = ssub.s32 %s19, 1
      %s25 = ssub.s32 %s19, 2
      %s26 = sadd.s32 %s19, 1
      %s27 = ssub.s32 %s19, %s26
      %p28 = scmp.eq.s32.totalorder %s27, 0
      %s30 = sadd.s32 %s29, 1
      %s31 = scalar_select %p28, %s29, %s30
      %p34 = pneg %p28
      %p35 = scmp.eq.s32.totalorder %s19, 1
      %p36 = por %p34, %p35
      %p37 = scmp.ne.s32.totalorder %s29, %s32
      %p38 = scmp.eq.s32.totalorder %s19, 0
      %p39 = por %p37, %p38
      %p40 = scmp.ne.s32.totalorder %s29, %s32
      %p41 = scmp.eq.s32.totalorder %s24, 1
      %p42 = por %p40, %p41
      %p43 = scmp.ne.s32.totalorder %s32, %s33
      %p44 = scmp.eq.s32.totalorder %s24, 0
      %p45 = por %p43, %p44
      %p46 = scmp.ne.s32.totalorder %s32, %s33
      %p47 = scmp.eq.s32.totalorder %s25, 1
      %p48 = por %p46, %p47
      %p50 = scmp.ne.s32.totalorder %s33, %s49
      %p51 = scmp.eq.s32.totalorder %s25, 0
      %p52 = por %p50, %p51
      %s54 = sadd.s32 %s53, 1
      %p57 = scmp.eq.s32.totalorder %s19, 1
      %p58 = scmp.ne.s32.totalorder %s53, %s55
      %p59 = scmp.eq.s32.totalorder %s19, 0
      %p60 = por %p58, %p59
      %p61 = scmp.ne.s32.totalorder %s53, %s55
      %p62 = scmp.eq.s32.totalorder %s24, 1
      %p63 = por %p61, %p62
      %p64 = scmp.ne.s32.totalorder %s55, %s56
      %p65 = scmp.eq.s32.totalorder %s24, 0
      %p66 = por %p64, %p65
      %p67 = scmp.ne.s32.totalorder %s55, %s56
      %p68 = scmp.eq.s32.totalorder %s25, 1
      %p69 = por %p67, %p68
      %p71 = scmp.ne.s32.totalorder %s56, %s70
      %p72 = scmp.eq.s32.totalorder %s25, 0
      %p73 = por %p71, %p72
      %s75 = sadd.s32 %s74, 1
      %p78 = scmp.eq.s32.totalorder %s19, 1
      %p79 = scmp.ne.s32.totalorder %s74, %s76
      %p80 = scmp.eq.s32.totalorder %s19, 0
      %p81 = por %p79, %p80
      %p82 = scmp.ne.s32.totalorder %s74, %s76
      %p83 = scmp.eq.s32.totalorder %s24, 1
      %p84 = por %p82, %p83
      %p85 = scmp.ne.s32.totalorder %s76, %s77
      %p86 = scmp.eq.s32.totalorder %s24, 0
      %p87 = por %p85, %p86
      %p88 = scmp.ne.s32.totalorder %s76, %s77
      %p89 = scmp.eq.s32.totalorder %s25, 1
      %p90 = por %p88, %p89
      %p92 = scmp.ne.s32.totalorder %s77, %s91
      %p93 = scmp.eq.s32.totalorder %s25, 0
      %p94 = por %p92, %p93
      %s96 = sadd.s32 %s95, 1
      %p99 = scmp.eq.s32.totalorder %s19, 1
      %p100 = scmp.ne.s32.totalorder %s95, %s97
      %p101 = scmp.eq.s32.totalorder %s19, 0
      %p102 = por %p100, %p101
      %p103 = scmp.ne.s32.totalorder %s95, %s97
      %p104 = scmp.eq.s32.totalorder %s24, 1
      %p105 = por %p103, %p104
      %p106 = scmp.ne.s32.totalorder %s97, %s98
      %p107 = scmp.eq.s32.totalorder %s24, 0
      %p108 = por %p106, %p107
      %p109 = scmp.ne.s32.totalorder %s97, %s98
      %p110 = scmp.eq.s32.totalorder %s25, 1
      %p111 = por %p109, %p110
      %p113 = scmp.ne.s32.totalorder %s98, %s112
      %p114 = scmp.eq.s32.totalorder %s25, 0
      %p115 = por %p113, %p114
      %s117 = sadd.s32 %s116, 1
      %p120 = scmp.eq.s32.totalorder %s19, 1
      %p121 = scmp.ne.s32.totalorder %s116, %s118
      %p122 = scmp.eq.s32.totalorder %s19, 0
      %p123 = por %p121, %p122
      %p124 = scmp.ne.s32.totalorder %s116, %s118
      %p125 = scmp.eq.s32.totalorder %s24, 1
      %p126 = por %p124, %p125
      %p127 = scmp.ne.s32.totalorder %s118, %s119
      %p128 = scmp.eq.s32.totalorder %s24, 0
      %p129 = por %p127, %p128
      %p130 = scmp.ne.s32.totalorder %s118, %s119
      %p131 = scmp.eq.s32.totalorder %s25, 1
      %p132 = por %p130, %p131
      %p134 = scmp.ne.s32.totalorder %s119, %s133
      %p135 = scmp.eq.s32.totalorder %s25, 0
      %p136 = por %p134, %p135
      %s138 = sadd.s32 %s137, 1
      %p141 = scmp.eq.s32.totalorder %s19, 1
      %p142 = scmp.ne.s32.totalorder %s137, %s139
      %p143 = scmp.eq.s32.totalorder %s19, 0
      %p144 = por %p142, %p143
      %p145 = scmp.ne.s32.totalorder %s137, %s139
      %p146 = scmp.eq.s32.totalorder %s24, 1
      %p147 = por %p145, %p146
      %p148 = scmp.ne.s32.totalorder %s139, %s140
      %p149 = scmp.eq.s32.totalorder %s24, 0
      %p150 = por %p148, %p149
      %p151 = scmp.ne.s32.totalorder %s139, %s140
      %p152 = scmp.eq.s32.totalorder %s25, 1
      %p153 = por %p151, %p152
      %p155 = scmp.ne.s32.totalorder %s140, %s154
      %p156 = scmp.eq.s32.totalorder %s25, 0
      %p157 = por %p155, %p156
      %s159 = sadd.s32 %s158, 1
      %p162 = scmp.eq.s32.totalorder %s19, 1
      %p163 = scmp.ne.s32.totalorder %s158, %s160
      %p164 = scmp.eq.s32.totalorder %s19, 0
      %p165 = por %p163, %p164
      %p166 = scmp.ne.s32.totalorder %s158, %s160
      %p167 = scmp.eq.s32.totalorder %s24, 1
      %p168 = por %p166, %p167
      %p169 = scmp.ne.s32.totalorder %s160, %s161
      %p170 = scmp.eq.s32.totalorder %s24, 0
      %p171 = por %p169, %p170
      %p172 = scmp.ne.s32.totalorder %s160, %s161
      %p173 = scmp.eq.s32.totalorder %s25, 1
      %p174 = por %p172, %p173
      %p176 = scmp.ne.s32.totalorder %s161, %s175
      %p177 = scmp.eq.s32.totalorder %s25, 0
      %p178 = por %p176, %p177
      %s180 = sadd.s32 %s179, 1
      %p183 = scmp.eq.s32.totalorder %s19, 1
      %p184 = scmp.ne.s32.totalorder %s179, %s181
      %p185 = scmp.eq.s32.totalorder %s19, 0
      %p186 = por %p184, %p185
      %p187 = scmp.ne.s32.totalorder %s179, %s181
      %p188 = scmp.eq.s32.totalorder %s24, 1
      %p189 = por %p187, %p188
      %p190 = scmp.ne.s32.totalorder %s181, %s182
      %p191 = scmp.eq.s32.totalorder %s24, 0
      %p192 = por %p190, %p191
      %p193 = scmp.ne.s32.totalorder %s181, %s182
      %p194 = scmp.eq.s32.totalorder %s25, 1
      %p195 = por %p193, %p194
      %p197 = scmp.ne.s32.totalorder %s182, %s196
      %p198 = scmp.eq.s32.totalorder %s25, 0
      %p199 = por %p197, %p198
      %s201 = sadd.s32 %s200, 1
      %p204 = scmp.eq.s32.totalorder %s19, 1
      %p205 = scmp.ne.s32.totalorder %s200, %s202
      %p206 = scmp.eq.s32.totalorder %s19, 0
      %p207 = por %p205, %p206
      %p208 = scmp.ne.s32.totalorder %s200, %s202
      %p209 = scmp.eq.s32.totalorder %s24, 1
      %p210 = por %p208, %p209
      %p211 = scmp.ne.s32.totalorder %s202, %s203
      %p212 = scmp.eq.s32.totalorder %s24, 0
      %p213 = por %p211, %p212
      %p214 = scmp.ne.s32.totalorder %s202, %s203
      %p215 = scmp.eq.s32.totalorder %s25, 1
      %p216 = por %p214, %p215
      %p218 = scmp.ne.s32.totalorder %s203, %s217
      %p219 = scmp.eq.s32.totalorder %s25, 0
      %p220 = por %p218, %p219
      %s221 = ssub.s32 %s19, %s26
      %p222 = scmp.eq.s32.totalorder %s221, 0
      %s224 = sadd.s32 %s223, 1
      %s225 = scalar_select %p222, %s223, %s224
      %p228 = pneg %p222
      %p229 = scmp.eq.s32.totalorder %s19, 1
      %p230 = por %p228, %p229
      %p231 = scmp.ne.s32.totalorder %s223, %s226
      %p232 = scmp.eq.s32.totalorder %s19, 0
      %p233 = por %p231, %p232
      %p234 = scmp.ne.s32.totalorder %s223, %s226
      %p235 = scmp.eq.s32.totalorder %s24, 1
      %p236 = por %p234, %p235
      %p237 = scmp.ne.s32.totalorder %s226, %s227
      %p238 = scmp.eq.s32.totalorder %s24, 0
      %p239 = por %p237, %p238
      %p240 = scmp.ne.s32.totalorder %s226, %s227
      %p241 = scmp.eq.s32.totalorder %s25, 1
      %p242 = por %p240, %p241
      %p244 = scmp.ne.s32.totalorder %s227, %s243
      %p245 = scmp.eq.s32.totalorder %s25, 0
      %p246 = por %p244, %p245
      %p247 = scmp.le.s32.totalorder 1, %s19
      %p248 = scmp.lt.s32.totalorder %s19, 3
      %p249 = pnand %p247, %p248
      %p250 = pneg %p249
      // Predicated region
      $region9: #{tpu_custom_call.1} parent=5 // pred_check
        _
      $region10: #{tpu_custom_call.1} parent=5 // pred_check_branch
        %252 = sbr.rel (%p249) target = $region12
      $region11: #{tpu_custom_call.1} parent=5 // pred_region
        %s253 = ssub.s32 %s19, 1
        // Predicated region
        $region13: #{tpu_custom_call.1} parent=11 // pred_check
          %p254 = pneg %p66
        $region14: #{tpu_custom_call.1} parent=11 // pred_check_branch
          %256 = sbr.rel (%p254) target = $region16
        $region15: #{tpu_custom_call.1} parent=11 // pred_region
          _
        $region16: #{tpu_custom_call.1} parent=11 // pred_fallthru
          _
        // Predicated region
        $region17: #{tpu_custom_call.1} parent=11 // pred_check
          %p257 = pneg %p87
        $region18: #{tpu_custom_call.1} parent=11 // pred_check_branch
          %259 = sbr.rel (%p257) target = $region20
        $region19: #{tpu_custom_call.1} parent=11 // pred_region
          _
        $region20: #{tpu_custom_call.1} parent=11 // pred_fallthru
          _
        // Predicated region
        $region21: #{tpu_custom_call.1} parent=11 // pred_check
          %p260 = pneg %p108
        $region22: #{tpu_custom_call.1} parent=11 // pred_check_branch
          %262 = sbr.rel (%p260) target = $region24
        $region23: #{tpu_custom_call.1} parent=11 // pred_region
          _
        $region24: #{tpu_custom_call.1} parent=11 // pred_fallthru
          _
        // Predicated region
        $region25: #{tpu_custom_call.1} parent=11 // pred_check
          %p263 = pneg %p129
        $region26: #{tpu_custom_call.1} parent=11 // pred_check_branch
          %265 = sbr.rel (%p263) target = $region28
        $region27: #{tpu_custom_call.1} parent=11 // pred_region
          _
        $region28: #{tpu_custom_call.1} parent=11 // pred_fallthru
          _
        // Predicated region
        $region29: #{tpu_custom_call.1} parent=11 // pred_check
          %p266 = pneg %p150
        $region30: #{tpu_custom_call.1} parent=11 // pred_check_branch
          %268 = sbr.rel (%p266) target = $region32
        $region31: #{tpu_custom_call.1} parent=11 // pred_region
          _
        $region32: #{tpu_custom_call.1} parent=11 // pred_fallthru
          _
        // Predicated region
        $region33: #{tpu_custom_call.1} parent=11 // pred_check
          %p269 = pneg %p171
        $region34: #{tpu_custom_call.1} parent=11 // pred_check_branch
          %271 = sbr.rel (%p269) target = $region36
        $region35: #{tpu_custom_call.1} parent=11 // pred_region
          _
        $region36: #{tpu_custom_call.1} parent=11 // pred_fallthru
          _
        // Predicated region
        $region37: #{tpu_custom_call.1} parent=11 // pred_check
          %p272 = pneg %p192
        $region38: #{tpu_custom_call.1} parent=11 // pred_check_branch
          %274 = sbr.rel (%p272) target = $region40
        $region39: #{tpu_custom_call.1} parent=11 // pred_region
          _
        $region40: #{tpu_custom_call.1} parent=11 // pred_fallthru
          _
        // Predicated region
        $region41: #{tpu_custom_call.1} parent=11 // pred_check
          %p275 = pneg %p213
        $region42: #{tpu_custom_call.1} parent=11 // pred_check_branch
          %277 = sbr.rel (%p275) target = $region44
        $region43: #{tpu_custom_call.1} parent=11 // pred_region
          _
        $region44: #{tpu_custom_call.1} parent=11 // pred_fallthru
          _
      $region12: #{tpu_custom_call.1} parent=5 // pred_fallthru
        _
      %p278 = scmp.lt.s32.totalorder %s19, 2
      // Predicated region
      $region45: #{tpu_custom_call.1} parent=5 // pred_check
        %p279 = pneg %p278
      $region46: #{tpu_custom_call.1} parent=5 // pred_check_branch
        %281 = sbr.rel (%p279) target = $region48
      $region47: #{tpu_custom_call.1} parent=5 // pred_region
        // Predicated region
        $region49: #{tpu_custom_call.1} parent=47 // pred_check
          %p282 = pneg %p39
        $region50: #{tpu_custom_call.1} parent=47 // pred_check_branch
          %284 = sbr.rel (%p282) target = $region52
        $region51: #{tpu_custom_call.1} parent=47 // pred_region
          %s285 = sand.u32 %s29, 1
          %s286 = sand.u32 %s29, 1
          %s287 = smul.addr %s286, 16
          %s288 = scalar_lea.vmem [#allocation3], %s287
          %s289 = smul.u32 2, %s19
          %s290 = smul.addr %s289, 4
          %s291 = scalar_lea.vmem %s0, %s290
          // Predicated region
          $region53: #{tpu_custom_call.1} parent=51 // pred_check
            _
          $region54: #{tpu_custom_call.1} parent=51 // pred_check_branch
            %293 = sbr.rel (0) target = $region56
          $region55: #{tpu_custom_call.1} parent=51 // pred_region
            // Predicated region
            $region57: #{tpu_custom_call.1} parent=55 // pred_check
              _
            $region58: #{tpu_custom_call.1} parent=55 // pred_check_branch
              %295 = sbr.rel (0) target = $region60
            $region59: #{tpu_custom_call.1} parent=55 // pred_region
              // Predicated region
              $region72: #{tpu_custom_call.1} parent=59 // pred_check
                _
              $region73: #{tpu_custom_call.1} parent=59 // pred_check_branch
                %313 = sbr.rel (0) target = $region75
              $region74: #{tpu_custom_call.1} parent=59 // pred_region
                loop: start=0, step=1, limit=1
                $region76: #{tpu_custom_call.1} parent=74 // loop_pre_header
                  _
                $region77: #{tpu_custom_call.1} parent=74 // loop_header
                  %s315 = sphi 0, %s319
                  %p316 = scmp.ge.s32.totalorder %s315, 1
                  %s320 = sphi %s291, %s291
                  %s321 = sphi %s288, %s288
                $region78: #{tpu_custom_call.1} parent=74 // loop_header_branch
                  %318 = sbr.rel (%p316) target = $region82
                $region79: #{tpu_custom_call.1} parent=74 // loop_body
                  %v322 = vld [vmem:[%s320] sm:$0xff]
                  %323 = vst [vmem:[%s321] sm:$0xff] %v322
                  %v324 = vld [vmem:[%s320 + $0x10] sm:$0xff]
                  %325 = vst [vmem:[%s321 + $0x8] sm:$0xff] %v324
                $region80: #{tpu_custom_call.1} parent=74 // loop_footer
                  %s319 = sadd.s32 1, %s315
                $region81: #{tpu_custom_call.1} parent=74 // loop_footer_branch
                  %314 = sbr.rel target = $region77
                $region82: #{tpu_custom_call.1} parent=74 // loop_exit
                  _
              $region75: #{tpu_custom_call.1} parent=59 // pred_fallthru
                _
              // Predicated region
              $region83: #{tpu_custom_call.1} parent=59 // pred_check
                _
              $region84: #{tpu_custom_call.1} parent=59 // pred_check_branch
                %327 = sbr.rel target = $region86
              $region85: #{tpu_custom_call.1} parent=59 // pred_region
                _
              $region86: #{tpu_custom_call.1} parent=59 // pred_fallthru
                _
            $region60: #{tpu_custom_call.1} parent=55 // pred_fallthru
              _
            // Predicated region
            $region61: #{tpu_custom_call.1} parent=55 // pred_check
              _
            $region62: #{tpu_custom_call.1} parent=55 // pred_check_branch
              %297 = sbr.rel target = $region64
            $region63: #{tpu_custom_call.1} parent=55 // pred_region
              %s299 = ssub.s32 256, 1
              loop: start=0, step=1, limit=1
              $region65: #{tpu_custom_call.1} parent=63 // loop_pre_header
                _
              $region66: #{tpu_custom_call.1} parent=63 // loop_header
                %s301 = sphi 0, %s305
                %p302 = scmp.ge.s32.totalorder %s301, 1
                %s306 = sphi %s291, %s291
                %s307 = sphi %s288, %s288
              $region67: #{tpu_custom_call.1} parent=63 // loop_header_branch
                %304 = sbr.rel (%p302) target = $region71
              $region68: #{tpu_custom_call.1} parent=63 // loop_body
                %v308 = vld [vmem:[%s306] sm:%s299]
                %309 = vst [vmem:[%s307] sm:%s299] %v308
                %v310 = vld [vmem:[%s306 + $0x10] sm:%s299]
                %311 = vst [vmem:[%s307 + $0x8] sm:%s299] %v310
              $region69: #{tpu_custom_call.1} parent=63 // loop_footer
                %s305 = sadd.s32 1, %s301
              $region70: #{tpu_custom_call.1} parent=63 // loop_footer_branch
                %300 = sbr.rel target = $region66
              $region71: #{tpu_custom_call.1} parent=63 // loop_exit
                _
            $region64: #{tpu_custom_call.1} parent=55 // pred_fallthru
              _
          $region56: #{tpu_custom_call.1} parent=51 // pred_fallthru
            _
          %328 = vnop
        $region52: #{tpu_custom_call.1} parent=47 // pred_fallthru
          _
      $region48: #{tpu_custom_call.1} parent=5 // pred_fallthru
        _
      %p329 = scmp.le.s32.totalorder 1, %s19
      %p330 = scmp.lt.s32.totalorder %s19, 3
      %p331 = pnand %p329, %p330
      %p332 = pneg %p331
      // Predicated region
      $region87: #{tpu_custom_call.1} parent=5 // pred_check
        _
      $region88: #{tpu_custom_call.1} parent=5 // pred_check_branch
        %334 = sbr.rel (%p331) target = $region90
      $region89: #{tpu_custom_call.1} parent=5 // pred_region
        %s335 = ssub.s32 %s19, 1
        %s336 = sand.u32 %s32, 1
        %s337 = sand.u32 %s32, 1
        %s338 = smul.addr %s337, 16
        %s339 = scalar_lea.vmem [#allocation3], %s338
        // Predicated region
        $region91: #{tpu_custom_call.1} parent=89 // pred_check
          %p340 = pneg %p45
        $region92: #{tpu_custom_call.1} parent=89 // pred_check_branch
          %342 = sbr.rel (%p340) target = $region94
        $region93: #{tpu_custom_call.1} parent=89 // pred_region
          _
        $region94: #{tpu_custom_call.1} parent=89 // pred_fallthru
          _
        %s343 = sand.u32 %s32, 1
        %s344 = sand.u32 %s32, 1
        %s345 = smul.addr %s344, 16
        %s346 = scalar_lea.vmem [#allocation3], %s345
        %p347 = pneg %p45
        %p348 = pneg %p42
        %p349 = pneg %p66
        %p350 = pneg %p63
        %p351 = pneg %p87
        %p352 = pneg %p84
        %p353 = pneg %p108
        %p354 = pneg %p105
        %p355 = pneg %p129
        %p356 = pneg %p126
        %p357 = pneg %p150
        %p358 = pneg %p147
        %p359 = pneg %p171
        %p360 = pneg %p168
        %p361 = pneg %p192
        %p362 = pneg %p189
        %p363 = pneg %p213
        %p364 = pneg %p210
        %p365 = pneg %p239
        %p366 = pneg %p236
        %s367 = sand.u32 %s226, 1
        %s368 = scalar_lea.sflag [#allocation5], %s367
        %s369 = sand.u32 %s226, 1
        %s370 = smul.addr %s369, 2
        %s371 = scalar_lea.vmem [#allocation4], %s370
        %s372 = smul.u32 2, %s24
        %s373 = smul.u32 2, %s24
        %v375 = vld [vmem:[%s1] sm:$0xf]
        %v376 = vld [vmem:[%s1 + $0x4] sm:$0xf]
        %v377 = vld [vmem:[%s1 + $0x8] sm:$0xf]
        %v378 = vld [vmem:[%s1 + $0xc] sm:$0xf]
        %v379 = vld [vmem:[%s1 + $0x10] sm:$0xf]
        %v380 = vld [vmem:[%s1 + $0x14] sm:$0xf]
        %v381 = vld [vmem:[%s1 + $0x18] sm:$0xf]
        %v382 = vld [vmem:[%s1 + $0x1c] sm:$0xf]
        %v383 = vld [vmem:[%s1 + $0x20] sm:$0xf]
        %v384 = vld [vmem:[%s1 + $0x24] sm:$0xf]
        %v385 = vld [vmem:[%s1 + $0x28] sm:$0xf]
        %v386 = vld [vmem:[%s1 + $0x2c] sm:$0xf]
        %v387 = vld [vmem:[%s1 + $0x30] sm:$0xf]
        %v388 = vld [vmem:[%s1 + $0x34] sm:$0xf]
        %v389 = vld [vmem:[%s1 + $0x38] sm:$0xf]
        %v390 = vld [vmem:[%s1 + $0x3c] sm:$0xf]
        %v391 = vld [vmem:[%s339] sm:$0xff]
        %v392 = vld [vmem:[%s339 + $0x8] sm:$0xff]
        %v393 = vld [vmem:[%s2] sm:$0xff]
        %v394 = vld [vmem:[%s2 + $0x8] sm:$0xff]
        %v395 = vld [vmem:[%s2 + $0x10] sm:$0xff]
        %v396 = vld [vmem:[%s2 + $0x18] sm:$0xff]
        %v397 = vld [vmem:[%s2 + $0x20] sm:$0xff]
        %v398 = vld [vmem:[%s2 + $0x28] sm:$0xff]
        %v399 = vld [vmem:[%s2 + $0x30] sm:$0xff]
        %v400 = vld [vmem:[%s2 + $0x38] sm:$0xff]
        %v401 = vld [vmem:[%s2 + $0x40] sm:$0xff]
        %v402 = vld [vmem:[%s2 + $0x48] sm:$0xff]
        %v403 = vld [vmem:[%s2 + $0x50] sm:$0xff]
        %v404 = vld [vmem:[%s2 + $0x58] sm:$0xff]
        %v405 = vld [vmem:[%s2 + $0x60] sm:$0xff]
        %v406 = vld [vmem:[%s2 + $0x68] sm:$0xff]
        %v407 = vld [vmem:[%s2 + $0x70] sm:$0xff]
        %v408 = vld [vmem:[%s2 + $0x78] sm:$0xff]
        %410 = vset.pattern.permute.xlu0 0
        %411 = vperm.xlu0 %410, %v393
        %v412 = vpop.permute.xlu0 %411
        %415 = vset.pattern.permute.xlu0 0
        %416 = vperm.xlu0 %415, %v394
        %v417 = vpop.permute.xlu0 %416
        %420 = vset.pattern.permute.xlu0 0
        %421 = vperm.xlu0 %420, %v395
        %v422 = vpop.permute.xlu0 %421
        %425 = vset.pattern.permute.xlu0 0
        %426 = vperm.xlu0 %425, %v396
        %v427 = vpop.permute.xlu0 %426
        %430 = vset.pattern.permute.xlu0 0
        %431 = vperm.xlu0 %430, %v397
        %v432 = vpop.permute.xlu0 %431
        %435 = vset.pattern.permute.xlu0 0
        %436 = vperm.xlu0 %435, %v398
        %v437 = vpop.permute.xlu0 %436
        %440 = vset.pattern.permute.xlu0 0
        %441 = vperm.xlu0 %440, %v399
        %v442 = vpop.permute.xlu0 %441
        %445 = vset.pattern.permute.xlu0 0
        %446 = vperm.xlu0 %445, %v400
        %v447 = vpop.permute.xlu0 %446
        %450 = vset.pattern.permute.xlu0 0
        %451 = vperm.xlu0 %450, %v401
        %v452 = vpop.permute.xlu0 %451
        %455 = vset.pattern.permute.xlu0 0
        %456 = vperm.xlu0 %455, %v402
        %v457 = vpop.permute.xlu0 %456
        %460 = vset.pattern.permute.xlu0 0
        %461 = vperm.xlu0 %460, %v403
        %v462 = vpop.permute.xlu0 %461
        %465 = vset.pattern.permute.xlu0 0
        %466 = vperm.xlu0 %465, %v404
        %v467 = vpop.permute.xlu0 %466
        %470 = vset.pattern.permute.xlu0 0
        %471 = vperm.xlu0 %470, %v405
        %v472 = vpop.permute.xlu0 %471
        %475 = vset.pattern.permute.xlu0 0
        %476 = vperm.xlu0 %475, %v406
        %v477 = vpop.permute.xlu0 %476
        %480 = vset.pattern.permute.xlu0 0
        %481 = vperm.xlu0 %480, %v407
        %v482 = vpop.permute.xlu0 %481
        %485 = vset.pattern.permute.xlu0 0
        %486 = vperm.xlu0 %485, %v408
        %v487 = vpop.permute.xlu0 %486
        %v505 = vunpack.c.l.b16 %v375
        %v506 = vunpack.c.l.b16 %v376
        %v507 = vunpack.c.l.b16 %v377
        %v508 = vunpack.c.l.b16 %v378
        %v509 = vunpack.c.l.b16 %v379
        %v510 = vunpack.c.l.b16 %v380
        %v511 = vunpack.c.l.b16 %v381
        %v512 = vunpack.c.l.b16 %v382
        %v513 = vunpack.c.l.b16 %v383
        %v514 = vunpack.c.l.b16 %v384
        %v515 = vunpack.c.l.b16 %v385
        %v516 = vunpack.c.l.b16 %v386
        %v517 = vunpack.c.l.b16 %v387
        %v518 = vunpack.c.l.b16 %v388
        %v519 = vunpack.c.l.b16 %v389
        %v520 = vunpack.c.l.b16 %v390
        %v521 = vpack.c.b16 %v506, %v505
        %v522 = vpack.c.b16 %v508, %v507
        %v523 = vpack.c.b16 %v510, %v509
        %v524 = vpack.c.b16 %v512, %v511
        %v525 = vpack.c.b16 %v514, %v513
        %v526 = vpack.c.b16 %v516, %v515
        %v527 = vpack.c.b16 %v518, %v517
        %v528 = vpack.c.b16 %v520, %v519
        %v531 = vunpack.c.l.b16 %v391
        %v532 = vunpack.c.h.b16 %v391
        %v533 = vunpack.c.l.b16 %v392
        %v534 = vunpack.c.h.b16 %v392
        %v535 = vpack.c.b16 %v533, %v531
        %v536 = vpack.c.b16 %v534, %v532
        %vm539 = vcmask 130048
        %v541 = vsel %vm539, %v521, 0
        %v544 = vsel %vm539, %v522, 0
        %v547 = vsel %vm539, %v523, 0
        %v550 = vsel %vm539, %v524, 0
        %v553 = vsel %vm539, %v525, 0
        %v556 = vsel %vm539, %v526, 0
        %v559 = vsel %vm539, %v527, 0
        %v562 = vsel %vm539, %v528, 0
        %564 = vmatpush.bf16.msra.mxu0 0
        %565 = vmatpush.bf16.msra.mxu0 0
        %566 = vmatpush.bf16.msra.mxu0 0
        %567 = vmatpush.bf16.msra.mxu0 0
        %568 = vmatpush.bf16.msra.mxu0 0
        %569 = vmatpush.bf16.msra.mxu0 0
        %570 = vmatpush.bf16.msra.mxu0 0
        %571 = vmatpush.bf16.msra.mxu0 %v535
        %572 = vmatmul.bf16.gmra.mxu0 %v541
        %v573 = vpop.f32.mrf.mxu0
        %v574 = vadd.f32 %v412, %v573
        %v575 = vpop.f32.mrf.mxu0
        %v576 = vadd.f32 %v417, %v575
        %577 = vmatmul.bf16.gmra.mxu0 %v544
        %v578 = vpop.f32.mrf.mxu0
        %v579 = vadd.f32 %v422, %v578
        %v580 = vpop.f32.mrf.mxu0
        %v581 = vadd.f32 %v427, %v580
        %582 = vmatmul.bf16.gmra.mxu0 %v547
        %v583 = vpop.f32.mrf.mxu0
        %v584 = vadd.f32 %v432, %v583
        %v585 = vpop.f32.mrf.mxu0
        %v586 = vadd.f32 %v437, %v585
        %587 = vmatmul.bf16.gmra.mxu0 %v550
        %v588 = vpop.f32.mrf.mxu0
        %v589 = vadd.f32 %v442, %v588
        %v590 = vpop.f32.mrf.mxu0
        %v591 = vadd.f32 %v447, %v590
        %592 = vmatmul.bf16.gmra.mxu0 %v553
        %v593 = vpop.f32.mrf.mxu0
        %v594 = vadd.f32 %v452, %v593
        %v595 = vpop.f32.mrf.mxu0
        %v596 = vadd.f32 %v457, %v595
        %597 = vmatmul.bf16.gmra.mxu0 %v556
        %v598 = vpop.f32.mrf.mxu0
        %v599 = vadd.f32 %v462, %v598
        %v600 = vpop.f32.mrf.mxu0
        %v601 = vadd.f32 %v467, %v600
        %602 = vmatmul.bf16.gmra.mxu0 %v559
        %v603 = vpop.f32.mrf.mxu0
        %v604 = vadd.f32 %v472, %v603
        %v605 = vpop.f32.mrf.mxu0
        %v606 = vadd.f32 %v477, %v605
        %607 = vmatmul.bf16.gmra.mxu0 %v562
        %v608 = vpop.f32.mrf.mxu0
        %v609 = vadd.f32 %v482, %v608
        %v610 = vpop.f32.mrf.mxu0
        %v611 = vadd.f32 %v487, %v610
        %612 = vdwg.mxu0
        %613 = vmatpush.bf16.msra.mxu0 0
        %614 = vmatpush.bf16.msra.mxu0 0
        %615 = vmatpush.bf16.msra.mxu0 0
        %616 = vmatpush.bf16.msra.mxu0 0
        %617 = vmatpush.bf16.msra.mxu0 0
        %618 = vmatpush.bf16.msra.mxu0 0
        %619 = vmatpush.bf16.msra.mxu0 0
        %620 = vmatpush.bf16.msra.mxu0 %v536
        %621 = vmatmul.bf16.gmra.mxu0 %v541
        %v622 = vpop.f32.mrf.mxu0
        %v623 = vadd.f32 %v412, %v622
        %v624 = vpop.f32.mrf.mxu0
        %v625 = vadd.f32 %v417, %v624
        %626 = vmatmul.bf16.gmra.mxu0 %v544
        %v627 = vpop.f32.mrf.mxu0
        %v628 = vadd.f32 %v422, %v627
        %v629 = vpop.f32.mrf.mxu0
        %v630 = vadd.f32 %v427, %v629
        %631 = vmatmul.bf16.gmra.mxu0 %v547
        %v632 = vpop.f32.mrf.mxu0
        %v633 = vadd.f32 %v432, %v632
        %v634 = vpop.f32.mrf.mxu0
        %v635 = vadd.f32 %v437, %v634
        %636 = vmatmul.bf16.gmra.mxu0 %v550
        %v637 = vpop.f32.mrf.mxu0
        %v638 = vadd.f32 %v442, %v637
        %v639 = vpop.f32.mrf.mxu0
        %v640 = vadd.f32 %v447, %v639
        %641 = vmatmul.bf16.gmra.mxu0 %v553
        %v642 = vpop.f32.mrf.mxu0
        %v643 = vadd.f32 %v452, %v642
        %v644 = vpop.f32.mrf.mxu0
        %v645 = vadd.f32 %v457, %v644
        %646 = vmatmul.bf16.gmra.mxu0 %v556
        %v647 = vpop.f32.mrf.mxu0
        %v648 = vadd.f32 %v462, %v647
        %v649 = vpop.f32.mrf.mxu0
        %v650 = vadd.f32 %v467, %v649
        %651 = vmatmul.bf16.gmra.mxu0 %v559
        %v652 = vpop.f32.mrf.mxu0
        %v653 = vadd.f32 %v472, %v652
        %v654 = vpop.f32.mrf.mxu0
        %v655 = vadd.f32 %v477, %v654
        %656 = vmatmul.bf16.gmra.mxu0 %v562
        %v657 = vpop.f32.mrf.mxu0
        %v658 = vadd.f32 %v482, %v657
        %v659 = vpop.f32.mrf.mxu0
        %v660 = vadd.f32 %v487, %v659
        %661 = vdwg.mxu0
        %v662 = vmax.f32 %v574, 0.0
        %v663 = vmax.f32 %v623, 0.0
        %v664 = vmax.f32 %v576, 0.0
        %v665 = vmax.f32 %v625, 0.0
        %v666 = vmax.f32 %v579, 0.0
        %v667 = vmax.f32 %v628, 0.0
        %v668 = vmax.f32 %v581, 0.0
        %v669 = vmax.f32 %v630, 0.0
        %v670 = vmax.f32 %v584, 0.0
        %v671 = vmax.f32 %v633, 0.0
        %v672 = vmax.f32 %v586, 0.0
        %v673 = vmax.f32 %v635, 0.0
        %v674 = vmax.f32 %v589, 0.0
        %v675 = vmax.f32 %v638, 0.0
        %v676 = vmax.f32 %v591, 0.0
        %v677 = vmax.f32 %v640, 0.0
        %v678 = vmax.f32 %v594, 0.0
        %v679 = vmax.f32 %v643, 0.0
        %v680 = vmax.f32 %v596, 0.0
        %v681 = vmax.f32 %v645, 0.0
        %v682 = vmax.f32 %v599, 0.0
        %v683 = vmax.f32 %v648, 0.0
        %v684 = vmax.f32 %v601, 0.0
        %v685 = vmax.f32 %v650, 0.0
        %v686 = vmax.f32 %v604, 0.0
        %v687 = vmax.f32 %v653, 0.0
        %v688 = vmax.f32 %v606, 0.0
        %v689 = vmax.f32 %v655, 0.0
        %v690 = vmax.f32 %v609, 0.0
        %v691 = vmax.f32 %v658, 0.0
        %v692 = vmax.f32 %v611, 0.0
        %v693 = vmax.f32 %v660, 0.0
        %v694 = vld [vmem:[%s3] sm:$0xf]
        %v695 = vld [vmem:[%s3 + $0x4] sm:$0xf]
        %v696 = vld [vmem:[%s3 + $0x8] sm:$0xf]
        %v697 = vld [vmem:[%s3 + $0xc] sm:$0xf]
        %v698 = vld [vmem:[%s3 + $0x10] sm:$0xf]
        %v699 = vld [vmem:[%s3 + $0x14] sm:$0xf]
        %v700 = vld [vmem:[%s3 + $0x18] sm:$0xf]
        %v701 = vld [vmem:[%s3 + $0x1c] sm:$0xf]
        %v702 = vld [vmem:[%s3 + $0x20] sm:$0xf]
        %v703 = vld [vmem:[%s3 + $0x24] sm:$0xf]
        %v704 = vld [vmem:[%s3 + $0x28] sm:$0xf]
        %v705 = vld [vmem:[%s3 + $0x2c] sm:$0xf]
        %v706 = vld [vmem:[%s3 + $0x30] sm:$0xf]
        %v707 = vld [vmem:[%s3 + $0x34] sm:$0xf]
        %v708 = vld [vmem:[%s3 + $0x38] sm:$0xf]
        %v709 = vld [vmem:[%s3 + $0x3c] sm:$0xf]
        %v710 = vpack.c.bf16 %v664, %v662
        %v711 = vpack.c.bf16 %v665, %v663
        %v712 = vpack.c.bf16 %v668, %v666
        %v713 = vpack.c.bf16 %v669, %v667
        %v714 = vpack.c.bf16 %v672, %v670
        %v715 = vpack.c.bf16 %v673, %v671
        %v716 = vpack.c.bf16 %v676, %v674
        %v717 = vpack.c.bf16 %v677, %v675
        %v718 = vpack.c.bf16 %v680, %v678
        %v719 = vpack.c.bf16 %v681, %v679
        %v720 = vpack.c.bf16 %v684, %v682
        %v721 = vpack.c.bf16 %v685, %v683
        %v722 = vpack.c.bf16 %v688, %v686
        %v723 = vpack.c.bf16 %v689, %v687
        %v724 = vpack.c.bf16 %v692, %v690
        %v725 = vpack.c.bf16 %v693, %v691
        %v726 = vld [vmem:[%s4] sm:$0xff]
        %v727 = vld [vmem:[%s4 + $0x8] sm:$0xff]
        %v728 = vld [vmem:[%s4 + $0x10] sm:$0xff]
        %v729 = vld [vmem:[%s4 + $0x18] sm:$0xff]
        %v730 = vld [vmem:[%s4 + $0x20] sm:$0xff]
        %v731 = vld [vmem:[%s4 + $0x28] sm:$0xff]
        %v732 = vld [vmem:[%s4 + $0x30] sm:$0xff]
        %v733 = vld [vmem:[%s4 + $0x38] sm:$0xff]
        %v734 = vld [vmem:[%s4 + $0x40] sm:$0xff]
        %v735 = vld [vmem:[%s4 + $0x48] sm:$0xff]
        %v736 = vld [vmem:[%s4 + $0x50] sm:$0xff]
        %v737 = vld [vmem:[%s4 + $0x58] sm:$0xff]
        %v738 = vld [vmem:[%s4 + $0x60] sm:$0xff]
        %v739 = vld [vmem:[%s4 + $0x68] sm:$0xff]
        %v740 = vld [vmem:[%s4 + $0x70] sm:$0xff]
        %v741 = vld [vmem:[%s4 + $0x78] sm:$0xff]
        %743 = vset.pattern.permute.xlu0 0
        %744 = vperm.xlu0 %743, %v726
        %v745 = vpop.permute.xlu0 %744
        %748 = vset.pattern.permute.xlu0 0
        %749 = vperm.xlu0 %748, %v727
        %v750 = vpop.permute.xlu0 %749
        %753 = vset.pattern.permute.xlu0 0
        %754 = vperm.xlu0 %753, %v728
        %v755 = vpop.permute.xlu0 %754
        %758 = vset.pattern.permute.xlu0 0
        %759 = vperm.xlu0 %758, %v729
        %v760 = vpop.permute.xlu0 %759
        %763 = vset.pattern.permute.xlu0 0
        %764 = vperm.xlu0 %763, %v730
        %v765 = vpop.permute.xlu0 %764
        %768 = vset.pattern.permute.xlu0 0
        %769 = vperm.xlu0 %768, %v731
        %v770 = vpop.permute.xlu0 %769
        %773 = vset.pattern.permute.xlu0 0
        %774 = vperm.xlu0 %773, %v732
        %v775 = vpop.permute.xlu0 %774
        %778 = vset.pattern.permute.xlu0 0
        %779 = vperm.xlu0 %778, %v733
        %v780 = vpop.permute.xlu0 %779
        %783 = vset.pattern.permute.xlu0 0
        %784 = vperm.xlu0 %783, %v734
        %v785 = vpop.permute.xlu0 %784
        %788 = vset.pattern.permute.xlu0 0
        %789 = vperm.xlu0 %788, %v735
        %v790 = vpop.permute.xlu0 %789
        %793 = vset.pattern.permute.xlu0 0
        %794 = vperm.xlu0 %793, %v736
        %v795 = vpop.permute.xlu0 %794
        %798 = vset.pattern.permute.xlu0 0
        %799 = vperm.xlu0 %798, %v737
        %v800 = vpop.permute.xlu0 %799
        %803 = vset.pattern.permute.xlu0 0
        %804 = vperm.xlu0 %803, %v738
        %v805 = vpop.permute.xlu0 %804
        %808 = vset.pattern.permute.xlu0 0
        %809 = vperm.xlu0 %808, %v739
        %v810 = vpop.permute.xlu0 %809
        %813 = vset.pattern.permute.xlu0 0
        %814 = vperm.xlu0 %813, %v740
        %v815 = vpop.permute.xlu0 %814
        %818 = vset.pattern.permute.xlu0 0
        %819 = vperm.xlu0 %818, %v741
        %v820 = vpop.permute.xlu0 %819
        %v838 = vunpack.c.l.b16 %v694
        %v839 = vunpack.c.l.b16 %v695
        %v840 = vunpack.c.l.b16 %v696
        %v841 = vunpack.c.l.b16 %v697
        %v842 = vunpack.c.l.b16 %v698
        %v843 = vunpack.c.l.b16 %v699
        %v844 = vunpack.c.l.b16 %v700
        %v845 = vunpack.c.l.b16 %v701
        %v846 = vunpack.c.l.b16 %v702
        %v847 = vunpack.c.l.b16 %v703
        %v848 = vunpack.c.l.b16 %v704
        %v849 = vunpack.c.l.b16 %v705
        %v850 = vunpack.c.l.b16 %v706
        %v851 = vunpack.c.l.b16 %v707
        %v852 = vunpack.c.l.b16 %v708
        %v853 = vunpack.c.l.b16 %v709
        %v854 = vpack.c.b16 %v839, %v838
        %v855 = vpack.c.b16 %v841, %v840
        %v856 = vpack.c.b16 %v843, %v842
        %v857 = vpack.c.b16 %v845, %v844
        %v858 = vpack.c.b16 %v847, %v846
        %v859 = vpack.c.b16 %v849, %v848
        %v860 = vpack.c.b16 %v851, %v850
        %v861 = vpack.c.b16 %v853, %v852
        %870 = vmatpush.bf16.msra.mxu0 %v724
        %871 = vmatpush.bf16.msra.mxu0 %v722
        %872 = vmatpush.bf16.msra.mxu0 %v720
        %873 = vmatpush.bf16.msra.mxu0 %v718
        %874 = vmatpush.bf16.msra.mxu0 %v716
        %875 = vmatpush.bf16.msra.mxu0 %v714
        %876 = vmatpush.bf16.msra.mxu0 %v712
        %877 = vmatpush.bf16.msra.mxu0 %v710
        %878 = vmatmul.bf16.gmra.mxu0 %v854
        %v879 = vpop.f32.mrf.mxu0
        %v880 = vadd.f32 %v745, %v879
        %v881 = vpop.f32.mrf.mxu0
        %v882 = vadd.f32 %v750, %v881
        %883 = vmatmul.bf16.gmra.mxu0 %v855
        %v884 = vpop.f32.mrf.mxu0
        %v885 = vadd.f32 %v755, %v884
        %v886 = vpop.f32.mrf.mxu0
        %v887 = vadd.f32 %v760, %v886
        %888 = vmatmul.bf16.gmra.mxu0 %v856
        %v889 = vpop.f32.mrf.mxu0
        %v890 = vadd.f32 %v765, %v889
        %v891 = vpop.f32.mrf.mxu0
        %v892 = vadd.f32 %v770, %v891
        %893 = vmatmul.bf16.gmra.mxu0 %v857
        %v894 = vpop.f32.mrf.mxu0
        %v895 = vadd.f32 %v775, %v894
        %v896 = vpop.f32.mrf.mxu0
        %v897 = vadd.f32 %v780, %v896
        %898 = vmatmul.bf16.gmra.mxu0 %v858
        %v899 = vpop.f32.mrf.mxu0
        %v900 = vadd.f32 %v785, %v899
        %v901 = vpop.f32.mrf.mxu0
        %v902 = vadd.f32 %v790, %v901
        %903 = vmatmul.bf16.gmra.mxu0 %v859
        %v904 = vpop.f32.mrf.mxu0
        %v905 = vadd.f32 %v795, %v904
        %v906 = vpop.f32.mrf.mxu0
        %v907 = vadd.f32 %v800, %v906
        %908 = vmatmul.bf16.gmra.mxu0 %v860
        %v909 = vpop.f32.mrf.mxu0
        %v910 = vadd.f32 %v805, %v909
        %v911 = vpop.f32.mrf.mxu0
        %v912 = vadd.f32 %v810, %v911
        %913 = vmatmul.bf16.gmra.mxu0 %v861
        %v914 = vpop.f32.mrf.mxu0
        %v915 = vadd.f32 %v815, %v914
        %v916 = vpop.f32.mrf.mxu0
        %v917 = vadd.f32 %v820, %v916
        %918 = vdwg.mxu0
        %919 = vmatpush.bf16.msra.mxu0 %v725
        %920 = vmatpush.bf16.msra.mxu0 %v723
        %921 = vmatpush.bf16.msra.mxu0 %v721
        %922 = vmatpush.bf16.msra.mxu0 %v719
        %923 = vmatpush.bf16.msra.mxu0 %v717
        %924 = vmatpush.bf16.msra.mxu0 %v715
        %925 = vmatpush.bf16.msra.mxu0 %v713
        %926 = vmatpush.bf16.msra.mxu0 %v711
        %927 = vmatmul.bf16.gmra.mxu0 %v854
        %v928 = vpop.f32.mrf.mxu0
        %v929 = vadd.f32 %v745, %v928
        %v930 = vpop.f32.mrf.mxu0
        %v931 = vadd.f32 %v750, %v930
        %932 = vmatmul.bf16.gmra.mxu0 %v855
        %v933 = vpop.f32.mrf.mxu0
        %v934 = vadd.f32 %v755, %v933
        %v935 = vpop.f32.mrf.mxu0
        %v936 = vadd.f32 %v760, %v935
        %937 = vmatmul.bf16.gmra.mxu0 %v856
        %v938 = vpop.f32.mrf.mxu0
        %v939 = vadd.f32 %v765, %v938
        %v940 = vpop.f32.mrf.mxu0
        %v941 = vadd.f32 %v770, %v940
        %942 = vmatmul.bf16.gmra.mxu0 %v857
        %v943 = vpop.f32.mrf.mxu0
        %v944 = vadd.f32 %v775, %v943
        %v945 = vpop.f32.mrf.mxu0
        %v946 = vadd.f32 %v780, %v945
        %947 = vmatmul.bf16.gmra.mxu0 %v858
        %v948 = vpop.f32.mrf.mxu0
        %v949 = vadd.f32 %v785, %v948
        %v950 = vpop.f32.mrf.mxu0
        %v951 = vadd.f32 %v790, %v950
        %952 = vmatmul.bf16.gmra.mxu0 %v859
        %v953 = vpop.f32.mrf.mxu0
        %v954 = vadd.f32 %v795, %v953
        %v955 = vpop.f32.mrf.mxu0
        %v956 = vadd.f32 %v800, %v955
        %957 = vmatmul.bf16.gmra.mxu0 %v860
        %v958 = vpop.f32.mrf.mxu0
        %v959 = vadd.f32 %v805, %v958
        %v960 = vpop.f32.mrf.mxu0
        %v961 = vadd.f32 %v810, %v960
        %962 = vmatmul.bf16.gmra.mxu0 %v861
        %v963 = vpop.f32.mrf.mxu0
        %v964 = vadd.f32 %v815, %v963
        %v965 = vpop.f32.mrf.mxu0
        %v966 = vadd.f32 %v820, %v965
        %967 = vdwg.mxu0
        %v968 = vmax.f32 %v880, 0.0
        %v969 = vmax.f32 %v929, 0.0
        %v970 = vmax.f32 %v882, 0.0
        %v971 = vmax.f32 %v931, 0.0
        %v972 = vmax.f32 %v885, 0.0
        %v973 = vmax.f32 %v934, 0.0
        %v974 = vmax.f32 %v887, 0.0
        %v975 = vmax.f32 %v936, 0.0
        %v976 = vmax.f32 %v890, 0.0
        %v977 = vmax.f32 %v939, 0.0
        %v978 = vmax.f32 %v892, 0.0
        %v979 = vmax.f32 %v941, 0.0
        %v980 = vmax.f32 %v895, 0.0
        %v981 = vmax.f32 %v944, 0.0
        %v982 = vmax.f32 %v897, 0.0
        %v983 = vmax.f32 %v946, 0.0
        %v984 = vmax.f32 %v900, 0.0
        %v985 = vmax.f32 %v949, 0.0
        %v986 = vmax.f32 %v902, 0.0
        %v987 = vmax.f32 %v951, 0.0
        %v988 = vmax.f32 %v905, 0.0
        %v989 = vmax.f32 %v954, 0.0
        %v990 = vmax.f32 %v907, 0.0
        %v991 = vmax.f32 %v956, 0.0
        %v992 = vmax.f32 %v910, 0.0
        %v993 = vmax.f32 %v959, 0.0
        %v994 = vmax.f32 %v912, 0.0
        %v995 = vmax.f32 %v961, 0.0
        %v996 = vmax.f32 %v915, 0.0
        %v997 = vmax.f32 %v964, 0.0
        %v998 = vmax.f32 %v917, 0.0
        %v999 = vmax.f32 %v966, 0.0
        %v1000 = vld [vmem:[%s5] sm:$0xf]
        %v1001 = vld [vmem:[%s5 + $0x4] sm:$0xf]
        %v1002 = vld [vmem:[%s5 + $0x8] sm:$0xf]
        %v1003 = vld [vmem:[%s5 + $0xc] sm:$0xf]
        %v1004 = vld [vmem:[%s5 + $0x10] sm:$0xf]
        %v1005 = vld [vmem:[%s5 + $0x14] sm:$0xf]
        %v1006 = vld [vmem:[%s5 + $0x18] sm:$0xf]
        %v1007 = vld [vmem:[%s5 + $0x1c] sm:$0xf]
        %v1008 = vld [vmem:[%s5 + $0x20] sm:$0xf]
        %v1009 = vld [vmem:[%s5 + $0x24] sm:$0xf]
        %v1010 = vld [vmem:[%s5 + $0x28] sm:$0xf]
        %v1011 = vld [vmem:[%s5 + $0x2c] sm:$0xf]
        %v1012 = vld [vmem:[%s5 + $0x30] sm:$0xf]
        %v1013 = vld [vmem:[%s5 + $0x34] sm:$0xf]
        %v1014 = vld [vmem:[%s5 + $0x38] sm:$0xf]
        %v1015 = vld [vmem:[%s5 + $0x3c] sm:$0xf]
        %v1016 = vpack.c.bf16 %v970, %v968
        %v1017 = vpack.c.bf16 %v971, %v969
        %v1018 = vpack.c.bf16 %v974, %v972
        %v1019 = vpack.c.bf16 %v975, %v973
        %v1020 = vpack.c.bf16 %v978, %v976
        %v1021 = vpack.c.bf16 %v979, %v977
        %v1022 = vpack.c.bf16 %v982, %v980
        %v1023 = vpack.c.bf16 %v983, %v981
        %v1024 = vpack.c.bf16 %v986, %v984
        %v1025 = vpack.c.bf16 %v987, %v985
        %v1026 = vpack.c.bf16 %v990, %v988
        %v1027 = vpack.c.bf16 %v991, %v989
        %v1028 = vpack.c.bf16 %v994, %v992
        %v1029 = vpack.c.bf16 %v995, %v993
        %v1030 = vpack.c.bf16 %v998, %v996
        %v1031 = vpack.c.bf16 %v999, %v997
        %v1032 = vld [vmem:[%s6] sm:$0xff]
        %v1033 = vld [vmem:[%s6 + $0x8] sm:$0xff]
        %v1034 = vld [vmem:[%s6 + $0x10] sm:$0xff]
        %v1035 = vld [vmem:[%s6 + $0x18] sm:$0xff]
        %v1036 = vld [vmem:[%s6 + $0x20] sm:$0xff]
        %v1037 = vld [vmem:[%s6 + $0x28] sm:$0xff]
        %v1038 = vld [vmem:[%s6 + $0x30] sm:$0xff]
        %v1039 = vld [vmem:[%s6 + $0x38] sm:$0xff]
        %v1040 = vld [vmem:[%s6 + $0x40] sm:$0xff]
        %v1041 = vld [vmem:[%s6 + $0x48] sm:$0xff]
        %v1042 = vld [vmem:[%s6 + $0x50] sm:$0xff]
        %v1043 = vld [vmem:[%s6 + $0x58] sm:$0xff]
        %v1044 = vld [vmem:[%s6 + $0x60] sm:$0xff]
        %v1045 = vld [vmem:[%s6 + $0x68] sm:$0xff]
        %v1046 = vld [vmem:[%s6 + $0x70] sm:$0xff]
        %v1047 = vld [vmem:[%s6 + $0x78] sm:$0xff]
        %1049 = vset.pattern.permute.xlu0 0
        %1050 = vperm.xlu0 %1049, %v1032
        %v1051 = vpop.permute.xlu0 %1050
        %1054 = vset.pattern.permute.xlu0 0
        %1055 = vperm.xlu0 %1054, %v1033
        %v1056 = vpop.permute.xlu0 %1055
        %1059 = vset.pattern.permute.xlu0 0
        %1060 = vperm.xlu0 %1059, %v1034
        %v1061 = vpop.permute.xlu0 %1060
        %1064 = vset.pattern.permute.xlu0 0
        %1065 = vperm.xlu0 %1064, %v1035
        %v1066 = vpop.permute.xlu0 %1065
        %1069 = vset.pattern.permute.xlu0 0
        %1070 = vperm.xlu0 %1069, %v1036
        %v1071 = vpop.permute.xlu0 %1070
        %1074 = vset.pattern.permute.xlu0 0
        %1075 = vperm.xlu0 %1074, %v1037
        %v1076 = vpop.permute.xlu0 %1075
        %1079 = vset.pattern.permute.xlu0 0
        %1080 = vperm.xlu0 %1079, %v1038
        %v1081 = vpop.permute.xlu0 %1080
        %1084 = vset.pattern.permute.xlu0 0
        %1085 = vperm.xlu0 %1084, %v1039
        %v1086 = vpop.permute.xlu0 %1085
        %1089 = vset.pattern.permute.xlu0 0
        %1090 = vperm.xlu0 %1089, %v1040
        %v1091 = vpop.permute.xlu0 %1090
        %1094 = vset.pattern.permute.xlu0 0
        %1095 = vperm.xlu0 %1094, %v1041
        %v1096 = vpop.permute.xlu0 %1095
        %1099 = vset.pattern.permute.xlu0 0
        %1100 = vperm.xlu0 %1099, %v1042
        %v1101 = vpop.permute.xlu0 %1100
        %1104 = vset.pattern.permute.xlu0 0
        %1105 = vperm.xlu0 %1104, %v1043
        %v1106 = vpop.permute.xlu0 %1105
        %1109 = vset.pattern.permute.xlu0 0
        %1110 = vperm.xlu0 %1109, %v1044
        %v1111 = vpop.permute.xlu0 %1110
        %1114 = vset.pattern.permute.xlu0 0
        %1115 = vperm.xlu0 %1114, %v1045
        %v1116 = vpop.permute.xlu0 %1115
        %1119 = vset.pattern.permute.xlu0 0
        %1120 = vperm.xlu0 %1119, %v1046
        %v1121 = vpop.permute.xlu0 %1120
        %1124 = vset.pattern.permute.xlu0 0
        %1125 = vperm.xlu0 %1124, %v1047
        %v1126 = vpop.permute.xlu0 %1125
        %v1144 = vunpack.c.l.b16 %v1000
        %v1145 = vunpack.c.l.b16 %v1001
        %v1146 = vunpack.c.l.b16 %v1002
        %v1147 = vunpack.c.l.b16 %v1003
        %v1148 = vunpack.c.l.b16 %v1004
        %v1149 = vunpack.c.l.b16 %v1005
        %v1150 = vunpack.c.l.b16 %v1006
        %v1151 = vunpack.c.l.b16 %v1007
        %v1152 = vunpack.c.l.b16 %v1008
        %v1153 = vunpack.c.l.b16 %v1009
        %v1154 = vunpack.c.l.b16 %v1010
        %v1155 = vunpack.c.l.b16 %v1011
        %v1156 = vunpack.c.l.b16 %v1012
        %v1157 = vunpack.c.l.b16 %v1013
        %v1158 = vunpack.c.l.b16 %v1014
        %v1159 = vunpack.c.l.b16 %v1015
        %v1160 = vpack.c.b16 %v1145, %v1144
        %v1161 = vpack.c.b16 %v1147, %v1146
        %v1162 = vpack.c.b16 %v1149, %v1148
        %v1163 = vpack.c.b16 %v1151, %v1150
        %v1164 = vpack.c.b16 %v1153, %v1152
        %v1165 = vpack.c.b16 %v1155, %v1154
        %v1166 = vpack.c.b16 %v1157, %v1156
        %v1167 = vpack.c.b16 %v1159, %v1158
        %1176 = vmatpush.bf16.msra.mxu0 %v1030
        %1177 = vmatpush.bf16.msra.mxu0 %v1028
        %1178 = vmatpush.bf16.msra.mxu0 %v1026
        %1179 = vmatpush.bf16.msra.mxu0 %v1024
        %1180 = vmatpush.bf16.msra.mxu0 %v1022
        %1181 = vmatpush.bf16.msra.mxu0 %v1020
        %1182 = vmatpush.bf16.msra.mxu0 %v1018
        %1183 = vmatpush.bf16.msra.mxu0 %v1016
        %1184 = vmatmul.bf16.gmra.mxu0 %v1160
        %v1185 = vpop.f32.mrf.mxu0
        %v1186 = vadd.f32 %v1051, %v1185
        %v1187 = vpop.f32.mrf.mxu0
        %v1188 = vadd.f32 %v1056, %v1187
        %1189 = vmatmul.bf16.gmra.mxu0 %v1161
        %v1190 = vpop.f32.mrf.mxu0
        %v1191 = vadd.f32 %v1061, %v1190
        %v1192 = vpop.f32.mrf.mxu0
        %v1193 = vadd.f32 %v1066, %v1192
        %1194 = vmatmul.bf16.gmra.mxu0 %v1162
        %v1195 = vpop.f32.mrf.mxu0
        %v1196 = vadd.f32 %v1071, %v1195
        %v1197 = vpop.f32.mrf.mxu0
        %v1198 = vadd.f32 %v1076, %v1197
        %1199 = vmatmul.bf16.gmra.mxu0 %v1163
        %v1200 = vpop.f32.mrf.mxu0
        %v1201 = vadd.f32 %v1081, %v1200
        %v1202 = vpop.f32.mrf.mxu0
        %v1203 = vadd.f32 %v1086, %v1202
        %1204 = vmatmul.bf16.gmra.mxu0 %v1164
        %v1205 = vpop.f32.mrf.mxu0
        %v1206 = vadd.f32 %v1091, %v1205
        %v1207 = vpop.f32.mrf.mxu0
        %v1208 = vadd.f32 %v1096, %v1207
        %1209 = vmatmul.bf16.gmra.mxu0 %v1165
        %v1210 = vpop.f32.mrf.mxu0
        %v1211 = vadd.f32 %v1101, %v1210
        %v1212 = vpop.f32.mrf.mxu0
        %v1213 = vadd.f32 %v1106, %v1212
        %1214 = vmatmul.bf16.gmra.mxu0 %v1166
        %v1215 = vpop.f32.mrf.mxu0
        %v1216 = vadd.f32 %v1111, %v1215
        %v1217 = vpop.f32.mrf.mxu0
        %v1218 = vadd.f32 %v1116, %v1217
        %1219 = vmatmul.bf16.gmra.mxu0 %v1167
        %v1220 = vpop.f32.mrf.mxu0
        %v1221 = vadd.f32 %v1121, %v1220
        %v1222 = vpop.f32.mrf.mxu0
        %v1223 = vadd.f32 %v1126, %v1222
        %1224 = vdwg.mxu0
        %1225 = vmatpush.bf16.msra.mxu0 %v1031
        %1226 = vmatpush.bf16.msra.mxu0 %v1029
        %1227 = vmatpush.bf16.msra.mxu0 %v1027
        %1228 = vmatpush.bf16.msra.mxu0 %v1025
        %1229 = vmatpush.bf16.msra.mxu0 %v1023
        %1230 = vmatpush.bf16.msra.mxu0 %v1021
        %1231 = vmatpush.bf16.msra.mxu0 %v1019
        %1232 = vmatpush.bf16.msra.mxu0 %v1017
        %1233 = vmatmul.bf16.gmra.mxu0 %v1160
        %v1234 = vpop.f32.mrf.mxu0
        %v1235 = vadd.f32 %v1051, %v1234
        %v1236 = vpop.f32.mrf.mxu0
        %v1237 = vadd.f32 %v1056, %v1236
        %1238 = vmatmul.bf16.gmra.mxu0 %v1161
        %v1239 = vpop.f32.mrf.mxu0
        %v1240 = vadd.f32 %v1061, %v1239
        %v1241 = vpop.f32.mrf.mxu0
        %v1242 = vadd.f32 %v1066, %v1241
        %1243 = vmatmul.bf16.gmra.mxu0 %v1162
        %v1244 = vpop.f32.mrf.mxu0
        %v1245 = vadd.f32 %v1071, %v1244
        %v1246 = vpop.f32.mrf.mxu0
        %v1247 = vadd.f32 %v1076, %v1246
        %1248 = vmatmul.bf16.gmra.mxu0 %v1163
        %v1249 = vpop.f32.mrf.mxu0
        %v1250 = vadd.f32 %v1081, %v1249
        %v1251 = vpop.f32.mrf.mxu0
        %v1252 = vadd.f32 %v1086, %v1251
        %1253 = vmatmul.bf16.gmra.mxu0 %v1164
        %v1254 = vpop.f32.mrf.mxu0
        %v1255 = vadd.f32 %v1091, %v1254
        %v1256 = vpop.f32.mrf.mxu0
        %v1257 = vadd.f32 %v1096, %v1256
        %1258 = vmatmul.bf16.gmra.mxu0 %v1165
        %v1259 = vpop.f32.mrf.mxu0
        %v1260 = vadd.f32 %v1101, %v1259
        %v1261 = vpop.f32.mrf.mxu0
        %v1262 = vadd.f32 %v1106, %v1261
        %1263 = vmatmul.bf16.gmra.mxu0 %v1166
        %v1264 = vpop.f32.mrf.mxu0
        %v1265 = vadd.f32 %v1111, %v1264
        %v1266 = vpop.f32.mrf.mxu0
        %v1267 = vadd.f32 %v1116, %v1266
        %1268 = vmatmul.bf16.gmra.mxu0 %v1167
        %v1269 = vpop.f32.mrf.mxu0
        %v1270 = vadd.f32 %v1121, %v1269
        %v1271 = vpop.f32.mrf.mxu0
        %v1272 = vadd.f32 %v1126, %v1271
        %1273 = vdwg.mxu0
        %v1274 = vmax.f32 %v1186, 0.0
        %v1275 = vmax.f32 %v1235, 0.0
        %v1276 = vmax.f32 %v1188, 0.0
        %v1277 = vmax.f32 %v1237, 0.0
        %v1278 = vmax.f32 %v1191, 0.0
        %v1279 = vmax.f32 %v1240, 0.0
        %v1280 = vmax.f32 %v1193, 0.0
        %v1281 = vmax.f32 %v1242, 0.0
        %v1282 = vmax.f32 %v1196, 0.0
        %v1283 = vmax.f32 %v1245, 0.0
        %v1284 = vmax.f32 %v1198, 0.0
        %v1285 = vmax.f32 %v1247, 0.0
        %v1286 = vmax.f32 %v1201, 0.0
        %v1287 = vmax.f32 %v1250, 0.0
        %v1288 = vmax.f32 %v1203, 0.0
        %v1289 = vmax.f32 %v1252, 0.0
        %v1290 = vmax.f32 %v1206, 0.0
        %v1291 = vmax.f32 %v1255, 0.0
        %v1292 = vmax.f32 %v1208, 0.0
        %v1293 = vmax.f32 %v1257, 0.0
        %v1294 = vmax.f32 %v1211, 0.0
        %v1295 = vmax.f32 %v1260, 0.0
        %v1296 = vmax.f32 %v1213, 0.0
        %v1297 = vmax.f32 %v1262, 0.0
        %v1298 = vmax.f32 %v1216, 0.0
        %v1299 = vmax.f32 %v1265, 0.0
        %v1300 = vmax.f32 %v1218, 0.0
        %v1301 = vmax.f32 %v1267, 0.0
        %v1302 = vmax.f32 %v1221, 0.0
        %v1303 = vmax.f32 %v1270, 0.0
        %v1304 = vmax.f32 %v1223, 0.0
        %v1305 = vmax.f32 %v1272, 0.0
        %v1306 = vld [vmem:[%s7] sm:$0x1]
        %v1307 = vpack.c.bf16 %v1276, %v1274
        %v1308 = vpack.c.bf16 %v1277, %v1275
        %v1309 = vpack.c.bf16 %v1280, %v1278
        %v1310 = vpack.c.bf16 %v1281, %v1279
        %v1311 = vpack.c.bf16 %v1284, %v1282
        %v1312 = vpack.c.bf16 %v1285, %v1283
        %v1313 = vpack.c.bf16 %v1288, %v1286
        %v1314 = vpack.c.bf16 %v1289, %v1287
        %v1315 = vpack.c.bf16 %v1292, %v1290
        %v1316 = vpack.c.bf16 %v1293, %v1291
        %v1317 = vpack.c.bf16 %v1296, %v1294
        %v1318 = vpack.c.bf16 %v1297, %v1295
        %v1319 = vpack.c.bf16 %v1300, %v1298
        %v1320 = vpack.c.bf16 %v1301, %v1299
        %v1321 = vpack.c.bf16 %v1304, %v1302
        %v1322 = vpack.c.bf16 %v1305, %v1303
        %s1323 = sld [smem:[#allocation2]]
        %v1324 = vstv %s1323
        %1325 = vmatpush.bf16.msra.mxu0 %v1321
        %1326 = vmatpush.bf16.msra.mxu0 %v1319
        %1327 = vmatpush.bf16.msra.mxu0 %v1317
        %1328 = vmatpush.bf16.msra.mxu0 %v1315
        %1329 = vmatpush.bf16.msra.mxu0 %v1313
        %1330 = vmatpush.bf16.msra.mxu0 %v1311
        %1331 = vmatpush.bf16.msra.mxu0 %v1309
        %1332 = vmatpush.bf16.msra.mxu0 %v1307
        %1333 = vmatmul.bf16.gmra.mxu0 %v1306
        %v1334 = vpop.f32.mrf.mxu0
        %v1335 = vadd.f32 %v1324, %v1334
        %v1336 = vpop.f32.mrf.mxu0
        %1337 = vdwg.mxu0
        %1338 = vmatpush.bf16.msra.mxu0 %v1322
        %1339 = vmatpush.bf16.msra.mxu0 %v1320
        %1340 = vmatpush.bf16.msra.mxu0 %v1318
        %1341 = vmatpush.bf16.msra.mxu0 %v1316
        %1342 = vmatpush.bf16.msra.mxu0 %v1314
        %1343 = vmatpush.bf16.msra.mxu0 %v1312
        %1344 = vmatpush.bf16.msra.mxu0 %v1310
        %1345 = vmatpush.bf16.msra.mxu0 %v1308
        %1346 = vmatmul.bf16.gmra.mxu0 %v1306
        %v1347 = vpop.f32.mrf.mxu0
        %v1348 = vadd.f32 %v1324, %v1347
        %v1349 = vpop.f32.mrf.mxu0
        %1350 = vdwg.mxu0
        %v1353 = vrot.slane %v1348, 7
        %vm1354 = vcmask 1040384
        %v1355 = vsel %vm1354, %v1335, %v1353
        %v1357 = vlaneseq
        %vm1358 = vcmp.ge.s32.totalorder %v1357, 0
        %vm1359 = vcmp.lt.s32.totalorder %v1357, 256
        %vm1360 = vmand %vm1358, %vm1359
        %1361 = vst.msk [vmem:[%s371] sm:$0x3] %vm1360, %v1355
        %s1362 = sand.u32 %s226, 1
        %s1363 = scalar_lea.sflag [#allocation5], %s1362
        %s1364 = sand.u32 %s226, 1
        %s1365 = smul.addr %s1364, 2
        %s1366 = scalar_lea.vmem [#allocation4], %s1365
        // Predicated region
        $region95: #{tpu_custom_call.1} parent=89 // pred_check
          %p1367 = pneg %p236
        $region96: #{tpu_custom_call.1} parent=89 // pred_check_branch
          %1369 = sbr.rel (%p1367) target = $region98
        $region97: #{tpu_custom_call.1} parent=89 // pred_region
          %s1370 = smul.u32 2, %s24
          %1372 = vsyncadd %s1363, 0
          %s1373 = scalar_lea.hbm %s9, %s1370
          %s1375 = sshll.u32 %s1366, 4
          %s1376 = int_to_ptr.vmem [resolvable:$true] %s1375
          %s1377 = sshll.u32 %s1373, 4
          %s1378 = int_to_ptr.hbm [resolvable:$true] %s1377
          %1380 = dma.vmem_to_hbm [thread:$0]  %s1376, 32, %s1378, %s1363
        $region98: #{tpu_custom_call.1} parent=89 // pred_fallthru
          _
      $region90: #{tpu_custom_call.1} parent=5 // pred_fallthru
        _
      %p1381 = scmp.le.s32.totalorder 2, %s19
      // Predicated region
      $region99: #{tpu_custom_call.1} parent=5 // pred_check
        %p1382 = pneg %p1381
      $region100: #{tpu_custom_call.1} parent=5 // pred_check_branch
        %1384 = sbr.rel (%p1382) target = $region102
      $region101: #{tpu_custom_call.1} parent=5 // pred_region
        %s1385 = ssub.s32 %s19, 2
        // Predicated region
        $region103: #{tpu_custom_call.1} parent=101 // pred_check
          %p1386 = pneg %p242
        $region104: #{tpu_custom_call.1} parent=101 // pred_check_branch
          %1388 = sbr.rel (%p1386) target = $region106
        $region105: #{tpu_custom_call.1} parent=101 // pred_region
          %s1389 = sand.u32 %s227, 1
          %s1390 = scalar_lea.sflag [#allocation5], %s1389
          %s1391 = sand.u32 %s227, 1
          %s1392 = smul.addr %s1391, 2
          %s1393 = scalar_lea.vmem [#allocation4], %s1392
          %1395 = dma.done %s1390, 32
        $region106: #{tpu_custom_call.1} parent=101 // pred_fallthru
          _
      $region102: #{tpu_custom_call.1} parent=5 // pred_fallthru
        _
    $region6: #{tpu_custom_call.1} parent=1 // loop_footer
      %s23 = sadd.s32 1, %s19
    $region7: #{tpu_custom_call.1} parent=1 // loop_footer_branch
      %18 = sbr.rel target = $region3
    $region8: #{tpu_custom_call.1} parent=1 // loop_exit
      _
    %1396 = vsyncpa [#allocation5], 1
    %s1397 = scalar_lea.sflag [#allocation5], 1
    %1398 = vsyncpa %s1397, 1

</llo_original>
